<compile_context>
chip_gen: v7x
topology: tpu7x:2x2x1
jax: 0.10.0
libtpu: 0.0.40
codegen_flags: <defaults>
</compile_context>

<pallas_src>
import jax
import jax.numpy as jnp
from jax.experimental import pallas as pl
from jax.experimental.pallas import tpu as pltpu

IN_FEATURES = 9
H1 = 200
H2 = 100
OUT_QUANTILES = 3
NEG_SLOPE = 0.01  # F.leaky_relu default negative_slope

# Lane-dense (multiple of 128) padded hidden widths.
H1_PAD = 256
H2_PAD = 128

DEFAULT_TB = 1024  # batch tile; safe on v5e/v6e (128 MiB VMEM) and v7x (64 MiB)


def _round_up(n, m):
    return (n + m - 1) // m * m


def _leaky_relu(x):
    return jnp.where(x > 0, x, NEG_SLOPE * x)


def quant_mlp_kernel(x_ref, w1_ref, b1_ref, w2_ref, b2_ref, w3_ref, b3_ref, o_ref):
    x = x_ref[...]  # [TB, IN_FEATURES]

    # fc1 + leaky_relu  (lane-dense [TB, 256])
    h = jnp.dot(x, w1_ref[...], preferred_element_type=jnp.float32) + b1_ref[...]
    h = _leaky_relu(h)

    # fc2 + leaky_relu  (lane-dense [TB, 128])
    h = jnp.dot(h, w2_ref[...], preferred_element_type=jnp.float32) + b2_ref[...]
    h = _leaky_relu(h)

    # fc3 (no activation) -> [TB, OUT_QUANTILES]
    o_ref[...] = (
        jnp.dot(h, w3_ref[...], preferred_element_type=jnp.float32) + b3_ref[...]
    ).astype(o_ref.dtype)


def _pad_params(params):
    """Zero-pad hidden dims to lane-dense widths. Numerically exact."""
    w1, b1, w2, b2, w3, b3 = params
    w1p = jnp.pad(w1, ((0, 0), (0, H1_PAD - H1)))
    b1p = jnp.pad(b1, ((0, 0), (0, H1_PAD - H1)))
    w2p = jnp.pad(w2, ((0, H1_PAD - H1), (0, H2_PAD - H2)))
    b2p = jnp.pad(b2, ((0, 0), (0, H2_PAD - H2)))
    w3p = jnp.pad(w3, ((0, H2_PAD - H2), (0, 0)))
    b3p = b3
    return w1p, b1p, w2p, b2p, w3p, b3p


def quant_model_forward(x, params, tb=DEFAULT_TB):
    """x: [B, IN_FEATURES] float32 -> [B, OUT_QUANTILES] float32."""
    w1p, b1p, w2p, b2p, w3p, b3p = _pad_params(params)

    B = x.shape[0]
    tb = min(tb, _round_up(B, 8))          # don't over-allocate for small batches
    b_pad = _round_up(B, tb)
    if b_pad != B:
        x = jnp.pad(x, ((0, b_pad - B), (0, 0)))

    grid = (b_pad // tb,)

    # Weights/biases: constant index_map -> DMA'd once, resident across grid.
    def const_spec(a):
        return pl.BlockSpec(a.shape, lambda i: (0, 0), memory_space=pltpu.VMEM)

    flops = 2 * B * (IN_FEATURES * H1 + H1 * H2 + H2 * OUT_QUANTILES)
    weight_bytes = 4 * (
        IN_FEATURES * H1 + H1 + H1 * H2 + H2 + H2 * OUT_QUANTILES + OUT_QUANTILES
    )
    bytes_accessed = 4 * B * (IN_FEATURES + OUT_QUANTILES) + weight_bytes

    out = pl.pallas_call(
        quant_mlp_kernel,
        out_shape=jax.ShapeDtypeStruct((b_pad, OUT_QUANTILES), jnp.float32),
        grid=grid,
        in_specs=[
            pl.BlockSpec((tb, IN_FEATURES), lambda i: (i, 0),
                         memory_space=pltpu.VMEM),
            const_spec(w1p), const_spec(b1p),
            const_spec(w2p), const_spec(b2p),
            const_spec(w3p), const_spec(b3p),
        ],
        out_specs=pl.BlockSpec((tb, OUT_QUANTILES), lambda i: (i, 0),
                               memory_space=pltpu.VMEM),
        compiler_params=pltpu.CompilerParams(
            dimension_semantics=("parallel",)),
        cost_estimate=pl.CostEstimate(
            flops=flops, transcendentals=0, bytes_accessed=bytes_accessed),
    )(x, w1p, b1p, w2p, b2p, w3p, b3p)

    return out[:B]


def init_params(key):
    """Deterministic init matching the nn.Linear shapes (weights pre-transposed
    to [in, out]); biases kept 2D [1, out] for TPU-friendly broadcasting."""
    k1, k2, k3, k4, k5, k6 = jax.random.split(key, 6)

    def uinit(k, fan_in, shape):
        bound = 1.0 / jnp.sqrt(float(fan_in))
        return jax.random.uniform(k, shape, jnp.float32, -bound, bound)

    w1 = uinit(k1, IN_FEATURES, (IN_FEATURES, H1))
    b1 = uinit(k2, IN_FEATURES, (1, H1))
    w2 = uinit(k3, H1, (H1, H2))
    b2 = uinit(k4, H1, (1, H2))
    w3 = uinit(k5, H2, (H2, OUT_QUANTILES))
    b3 = uinit(k6, H2, (1, OUT_QUANTILES))
    return (w1, b1, w2, b2, w3, b3)


def reference_forward(x, params):
    w1, b1, w2, b2, w3, b3 = params
    h = jax.nn.leaky_relu(x @ w1 + b1, NEG_SLOPE)
    h = jax.nn.leaky_relu(h @ w2 + b2, NEG_SLOPE)
    return h @ w3 + b3


if __name__ == "__main__":
    key = jax.random.PRNGKey(0)
    kx, kp = jax.random.split(key)

    B = 8
    x = jax.random.normal(kx, (B, IN_FEATURES), jnp.float32)
    params = init_params(kp)

    out = quant_model_forward(x, params)
    out = jax.block_until_ready(out)

    ref = reference_forward(x, params)
    assert out.shape == (B, OUT_QUANTILES)
    assert jnp.allclose(out, ref, atol=1e-4, rtol=1e-4)

    # Also exercise the tiled path with a batch that isn't a multiple of the tile.
    B2 = 1030
    x2 = jax.random.normal(kx, (B2, IN_FEATURES), jnp.float32)
    out2 = jax.block_until_ready(quant_model_forward(x2, params))
    ref2 = reference_forward(x2, params)
    assert out2.shape == (B2, OUT_QUANTILES)
    assert jnp.allclose(out2, ref2, atol=1e-4, rtol=1e-4)

    print("KERNEL_OK")
</pallas_src>

<mosaic_0001>
module attributes {stable_mosaic.version = 11 : i64} {
  func.func @quant_mlp_kernel(%arg0: i32, %arg1: memref<8x9xf32, #tpu.memory_space<vmem>>, %arg2: memref<9x256xf32, #tpu.memory_space<vmem>>, %arg3: memref<1x256xf32, #tpu.memory_space<vmem>>, %arg4: memref<256x128xf32, #tpu.memory_space<vmem>>, %arg5: memref<1x128xf32, #tpu.memory_space<vmem>>, %arg6: memref<128x3xf32, #tpu.memory_space<vmem>>, %arg7: memref<1x3xf32, #tpu.memory_space<vmem>>, %arg8: memref<8x3xf32, #tpu.memory_space<vmem>>) attributes {dimension_semantics = [#tpu.dimension_semantics<parallel>], iteration_bounds = array<i64: 1>, scalar_prefetch = 0 : i64, scratch_operands = 0 : i64, tpu.core_type = #tpu.core_type<tc>, window_params = [{transform_indices = @transform_0, window_bounds = array<i64: 8, 9>}, {pipeline_mode = #tpu.pipeline_mode<synchronous>, transform_indices = @transform_1, window_bounds = array<i64: 9, 256>}, {pipeline_mode = #tpu.pipeline_mode<synchronous>, transform_indices = @transform_2, window_bounds = array<i64: 1, 256>}, {pipeline_mode = #tpu.pipeline_mode<synchronous>, transform_indices = @transform_3, window_bounds = array<i64: 256, 128>}, {pipeline_mode = #tpu.pipeline_mode<synchronous>, transform_indices = @transform_4, window_bounds = array<i64: 1, 128>}, {pipeline_mode = #tpu.pipeline_mode<synchronous>, transform_indices = @transform_5, window_bounds = array<i64: 128, 3>}, {pipeline_mode = #tpu.pipeline_mode<synchronous>, transform_indices = @transform_6, window_bounds = array<i64: 1, 3>}, {transform_indices = @transform_7, window_bounds = array<i64: 8, 3>}]} {
    %c0 = arith.constant 0 : index
    %c0_0 = arith.constant 0 : index
    %0 = vector.load %arg1[%c0, %c0_0] : memref<8x9xf32, #tpu.memory_space<vmem>>, vector<8x9xf32>
    %c0_1 = arith.constant 0 : index
    %c0_2 = arith.constant 0 : index
    %1 = vector.load %arg2[%c0_1, %c0_2] : memref<9x256xf32, #tpu.memory_space<vmem>>, vector<9x256xf32>
    %cst = arith.constant dense<0.000000e+00> : vector<8x256xf32>
    %2 = tpu.matmul %0, %1, %cst {dimension_numbers = #tpu.dot_dimension_numbers<[1], [0], [0], [1], [0, 0, 1, 1], [], []>} : vector<8x9xf32>, vector<9x256xf32>, vector<8x256xf32> -> vector<8x256xf32>
    %c0_3 = arith.constant 0 : index
    %c0_4 = arith.constant 0 : index
    %3 = vector.load %arg3[%c0_3, %c0_4] : memref<1x256xf32, #tpu.memory_space<vmem>>, vector<1x256xf32>
    %4 = vector.broadcast %3 : vector<1x256xf32> to vector<8x256xf32>
    %5 = arith.addf %2, %4 : vector<8x256xf32>
    %cst_5 = arith.constant 0.000000e+00 : f32
    %6 = vector.broadcast %cst_5 : f32 to vector<8x256xf32>
    %7 = arith.cmpf ogt, %5, %6 : vector<8x256xf32>
    %cst_6 = arith.constant 0.00999999977 : f32
    %8 = vector.broadcast %cst_6 : f32 to vector<8x256xf32>
    %9 = arith.mulf %8, %5 : vector<8x256xf32>
    %10 = arith.select %7, %5, %9 : vector<8x256xi1>, vector<8x256xf32>
    %c0_7 = arith.constant 0 : index
    %c0_8 = arith.constant 0 : index
    %11 = vector.load %arg4[%c0_7, %c0_8] : memref<256x128xf32, #tpu.memory_space<vmem>>, vector<256x128xf32>
    %cst_9 = arith.constant dense<0.000000e+00> : vector<8x128xf32>
    %12 = tpu.matmul %10, %11, %cst_9 {dimension_numbers = #tpu.dot_dimension_numbers<[1], [0], [0], [1], [0, 0, 1, 1], [], []>} : vector<8x256xf32>, vector<256x128xf32>, vector<8x128xf32> -> vector<8x128xf32>
    %c0_10 = arith.constant 0 : index
    %c0_11 = arith.constant 0 : index
    %13 = vector.load %arg5[%c0_10, %c0_11] : memref<1x128xf32, #tpu.memory_space<vmem>>, vector<1x128xf32>
    %14 = vector.broadcast %13 : vector<1x128xf32> to vector<8x128xf32>
    %15 = arith.addf %12, %14 : vector<8x128xf32>
    %cst_12 = arith.constant 0.000000e+00 : f32
    %16 = vector.broadcast %cst_12 : f32 to vector<8x128xf32>
    %17 = arith.cmpf ogt, %15, %16 : vector<8x128xf32>
    %cst_13 = arith.constant 0.00999999977 : f32
    %18 = vector.broadcast %cst_13 : f32 to vector<8x128xf32>
    %19 = arith.mulf %18, %15 : vector<8x128xf32>
    %20 = arith.select %17, %15, %19 : vector<8x128xi1>, vector<8x128xf32>
    %c0_14 = arith.constant 0 : index
    %c0_15 = arith.constant 0 : index
    %21 = vector.load %arg6[%c0_14, %c0_15] : memref<128x3xf32, #tpu.memory_space<vmem>>, vector<128x3xf32>
    %cst_16 = arith.constant dense<0.000000e+00> : vector<8x3xf32>
    %22 = tpu.matmul %20, %21, %cst_16 {dimension_numbers = #tpu.dot_dimension_numbers<[1], [0], [0], [1], [0, 0, 1, 1], [], []>} : vector<8x128xf32>, vector<128x3xf32>, vector<8x3xf32> -> vector<8x3xf32>
    %c0_17 = arith.constant 0 : index
    %c0_18 = arith.constant 0 : index
    %23 = vector.load %arg7[%c0_17, %c0_18] : memref<1x3xf32, #tpu.memory_space<vmem>>, vector<1x3xf32>
    %24 = vector.broadcast %23 : vector<1x3xf32> to vector<8x3xf32>
    %25 = arith.addf %22, %24 : vector<8x3xf32>
    %c0_19 = arith.constant 0 : index
    %c0_20 = arith.constant 0 : index
    %26 = vector.load %arg8[%c0_19, %c0_20] : memref<8x3xf32, #tpu.memory_space<vmem>>, vector<8x3xf32>
    tpu.vector_store %arg8[%c0_19, %c0_20], %25 {strides = array<i32>} : memref<8x3xf32, #tpu.memory_space<vmem>>, vector<8x3xf32>,
    return
  }
  func.func @transform_0(%arg0: i32) -> (i32, i32) {
    %c0_i32 = arith.constant 0 : i32
    %c0_i32_0 = arith.constant 0 : i32
    return %arg0, %c0_i32 : i32, i32
  }
  func.func @transform_1(%arg0: i32) -> (i32, i32) {
    %c0_i32 = arith.constant 0 : i32
    %c0_i32_0 = arith.constant 0 : i32
    %c0_i32_1 = arith.constant 0 : i32
    return %c0_i32, %c0_i32_0 : i32, i32
  }
  func.func @transform_2(%arg0: i32) -> (i32, i32) {
    %c0_i32 = arith.constant 0 : i32
    %c0_i32_0 = arith.constant 0 : i32
    %c0_i32_1 = arith.constant 0 : i32
    return %c0_i32, %c0_i32_0 : i32, i32
  }
  func.func @transform_3(%arg0: i32) -> (i32, i32) {
    %c0_i32 = arith.constant 0 : i32
    %c0_i32_0 = arith.constant 0 : i32
    %c0_i32_1 = arith.constant 0 : i32
    return %c0_i32, %c0_i32_0 : i32, i32
  }
  func.func @transform_4(%arg0: i32) -> (i32, i32) {
    %c0_i32 = arith.constant 0 : i32
    %c0_i32_0 = arith.constant 0 : i32
    %c0_i32_1 = arith.constant 0 : i32
    return %c0_i32, %c0_i32_0 : i32, i32
  }
  func.func @transform_5(%arg0: i32) -> (i32, i32) {
    %c0_i32 = arith.constant 0 : i32
    %c0_i32_0 = arith.constant 0 : i32
    %c0_i32_1 = arith.constant 0 : i32
    return %c0_i32, %c0_i32_0 : i32, i32
  }
  func.func @transform_6(%arg0: i32) -> (i32, i32) {
    %c0_i32 = arith.constant 0 : i32
    %c0_i32_0 = arith.constant 0 : i32
    %c0_i32_1 = arith.constant 0 : i32
    return %c0_i32, %c0_i32_0 : i32, i32
  }
  func.func @transform_7(%arg0: i32) -> (i32, i32) {
    %c0_i32 = arith.constant 0 : i32
    %c0_i32_0 = arith.constant 0 : i32
    return %arg0, %c0_i32 : i32, i32
  }
}

</mosaic_0001>

<llo_original>
// kernel: tpu_custom_call.1
$region0: #{tpu_custom_call.1}
  #allocation0 [shape = 'u32[]', space=smem, size = 0x4, offset = 0x4, fixed_abs, tag = 'smem constant byte address 0x4 - core index']
  #allocation1 [shape = 'u32[144,128]{1,0:T(1,128)}', space=vmem, size = 0x12000, scoped, tag = 'internal scratch']
  %s0 = inlined_call_operand.vmem [shape: f32[8,9], index: 0, kind: input, shape index: {}]
  %s1 = inlined_call_operand.vmem [shape: f32[9,256], index: 1, kind: input, shape index: {}]
  %s2 = inlined_call_operand.vmem [shape: f32[1,256], index: 2, kind: input, shape index: {}]
  %s3 = inlined_call_operand.hbm [shape: f32[256,128], index: 3, kind: input, shape index: {}]
  %s4 = inlined_call_operand.vmem [shape: f32[1,128], index: 4, kind: input, shape index: {}]
  %s5 = inlined_call_operand.vmem [shape: f32[128,3], index: 5, kind: input, shape index: {}]
  %s6 = inlined_call_operand.vmem [shape: f32[1,3], index: 6, kind: input, shape index: {}]
  %s7 = inlined_call_operand.vmem [shape: f32[8,3], index: 7, kind: output, shape index: {}]
  %s8 = sld [smem:[#allocation0]]
  $region42: #{tpu_custom_call.1} parent=0
    _
  %s10 = ssub.s32 1, %s8
  %s11 = scalar_select 0, %s10, %s8
  $region1: #{tpu_custom_call.1} parent=0
    #allocation2 [shape = 'u8[131072]{0}', space=vmem, size = 0x20000, scoped, tag = 'input window, operand 3, single buffered']
    #allocation3 [shape = 's32[1]{0}', space=sflag, size = 0x4, scoped, tag = 'scoped memory for tpu_custom_call.1']
    %12 = vsyncpa [#allocation3], 0
    // Predicated region
    $region2: #{tpu_custom_call.1} parent=1 // pred_check
      _
    $region3: #{tpu_custom_call.1} parent=1 // pred_check_branch
      %14 = sbr.rel (0) target = $region5
    $region4: #{tpu_custom_call.1} parent=1 // pred_region
      _
    $region5: #{tpu_custom_call.1} parent=1 // pred_fallthru
      _
    // Predicated region
    $region6: #{tpu_custom_call.1} parent=1 // pred_check
      _
    $region7: #{tpu_custom_call.1} parent=1 // pred_check_branch
      %16 = sbr.rel (0) target = $region9
    $region8: #{tpu_custom_call.1} parent=1 // pred_region
      _
    $region9: #{tpu_custom_call.1} parent=1 // pred_fallthru
      _
    // Predicated region
    $region10: #{tpu_custom_call.1} parent=1 // pred_check
      _
    $region11: #{tpu_custom_call.1} parent=1 // pred_check_branch
      %18 = sbr.rel (0) target = $region13
    $region12: #{tpu_custom_call.1} parent=1 // pred_region
      _
    $region13: #{tpu_custom_call.1} parent=1 // pred_fallthru
      _
    // Predicated region
    $region14: #{tpu_custom_call.1} parent=1 // pred_check
      _
    $region15: #{tpu_custom_call.1} parent=1 // pred_check_branch
      %20 = sbr.rel (0) target = $region17
    $region16: #{tpu_custom_call.1} parent=1 // pred_region
      %s22 = ssub.s32 4096, 4096
      %23 = vsyncadd [#allocation3], %s22
      %s24 = sshll.u32 [#allocation2], 4
      %s25 = int_to_ptr.vmem [resolvable:$true] %s24
      %30 = dma.hbm_to_vmem [thread:$0]  %s3, 4096, %s25, [#allocation3], 128, 128, 8
    $region17: #{tpu_custom_call.1} parent=1 // pred_fallthru
      _
    // Predicated region
    $region18: #{tpu_custom_call.1} parent=1 // pred_check
      _
    $region19: #{tpu_custom_call.1} parent=1 // pred_check_branch
      %32 = sbr.rel (0) target = $region21
    $region20: #{tpu_custom_call.1} parent=1 // pred_region
      _
    $region21: #{tpu_custom_call.1} parent=1 // pred_fallthru
      _
    // Predicated region
    $region22: #{tpu_custom_call.1} parent=1 // pred_check
      _
    $region23: #{tpu_custom_call.1} parent=1 // pred_check_branch
      %34 = sbr.rel (0) target = $region25
    $region24: #{tpu_custom_call.1} parent=1 // pred_region
      _
    $region25: #{tpu_custom_call.1} parent=1 // pred_fallthru
      _
    // Predicated region
    $region26: #{tpu_custom_call.1} parent=1 // pred_check
      _
    $region27: #{tpu_custom_call.1} parent=1 // pred_check_branch
      %36 = sbr.rel (0) target = $region29
    $region28: #{tpu_custom_call.1} parent=1 // pred_region
      _
    $region29: #{tpu_custom_call.1} parent=1 // pred_fallthru
      _
    // Predicated region
    $region30: #{tpu_custom_call.1} parent=1 // pred_check
      _
    $region31: #{tpu_custom_call.1} parent=1 // pred_check_branch
      %38 = sbr.rel (0) target = $region33
    $region32: #{tpu_custom_call.1} parent=1 // pred_region
      %39 = dma.done [#allocation3], 4096
    $region33: #{tpu_custom_call.1} parent=1 // pred_fallthru
      _
    %v40 = vld [vmem:[%s0] sm:$0xff]
    %v41 = vld [vmem:[%s1] sm:$0xff]
    %v42 = vld [vmem:[%s1 + $0x8] sm:$0xff]
    %v43 = vld [vmem:[%s1 + $0x10] sm:$0x1]
    %v44 = vld [vmem:[%s1 + $0x18] sm:$0x1]
    %v45 = vld [vmem:[%s2] sm:$0x3]
    %v47 = vlaneseq
    %v48 = vshrl.u32 %v47, 7
    %v49 = vsub.s32 0, %v48
    %v50 = vrot.slane %v45, %v49
    %v51 = vlaneseq
    %v52 = vshrl.u32 %v51, 7
    %v53 = vsub.s32 1, %v52
    %v54 = vrot.slane %v45, %v53
    %vm57 = vcmask 72704
    %v59 = vsel %vm57, %v40, 0
    %vm61 = vcmask 1040384
    %v63 = vsel %vm61, %v43, 0
    %v66 = vsel %vm61, %v44, 0
    %68 = vmatprep.subr.mxu0 %v42
    %69 = vmatpush1.msra.mxu0 %v41
    %70 = vmatprep.subr.mxu0 %v66
    %71 = vmatpush1.msra.mxu0 %v63
    %72 = vmatprep.subr.mxu0 0.0
    %73 = vmatpush1.msra.mxu0 0.0
    %74 = vmatprep.subr.mxu0 0.0
    %75 = vmatpush1.msra.mxu0 0.0
    %76 = vmatprep.subr.mxu0 0.0
    %77 = vmatpush1.msra.mxu0 0.0
    %78 = vmatprep.subr.mxu0 0.0
    %79 = vmatpush1.msra.mxu0 0.0
    %80 = vmatprep.subr.mxu0 0.0
    %81 = vmatpush1.msra.mxu0 0.0
    %82 = vmatprep.subr.mxu0 0.0
    %83 = vmatpush1.msra.mxu0 0.0
    %84 = vmatprep.subr.mxu0 0.0
    %85 = vmatpush1.msra.mxu0 0.0
    %86 = vmatprep.subr.mxu0 0.0
    %87 = vmatpush1.msra.mxu0 0.0
    %88 = vmatprep.subr.mxu0 0.0
    %89 = vmatpush1.msra.mxu0 0.0
    %90 = vmatprep.subr.mxu0 0.0
    %91 = vmatpush1.msra.mxu0 0.0
    %92 = vmatprep.subr.mxu0 0.0
    %93 = vmatpush1.msra.mxu0 0.0
    %94 = vmatprep.subr.mxu0 0.0
    %95 = vmatpush1.msra.mxu0 0.0
    %96 = vmatprep.subr.mxu0 0.0
    %97 = vmatpush1.msra.mxu0 0.0
    %98 = vmatprep.subr.mxu0 0.0
    %99 = vmatpush1.msra.mxu0 0.0
    %100 = vmatprep.subr.mxu0 0.0
    %101 = vmatpush1.msra.mxu0 0.0
    %102 = vmatprep.subr.mxu0 0.0
    %103 = vmatpush1.msra.mxu0 0.0
    %104 = vmatprep.subr.mxu0 0.0
    %105 = vmatpush1.msra.mxu0 0.0
    %106 = vmatprep.subr.mxu0 0.0
    %107 = vmatpush1.msra.mxu0 0.0
    %108 = vmatprep.subr.mxu0 0.0
    %109 = vmatpush1.msra.mxu0 0.0
    %110 = vmatprep.subr.mxu0 0.0
    %111 = vmatpush1.msra.mxu0 0.0
    %112 = vmatprep.subr.mxu0 0.0
    %113 = vmatpush1.msra.mxu0 0.0
    %114 = vmatprep.subr.mxu0 0.0
    %115 = vmatpush1.msra.mxu0 0.0
    %116 = vmatprep.subr.mxu0 0.0
    %117 = vmatpush1.msra.mxu0 0.0
    %118 = vmatprep.subr.mxu0 0.0
    %119 = vmatpush1.msra.mxu0 0.0
    %120 = vmatprep.subr.mxu0 0.0
    %121 = vmatpush1.msra.mxu0 0.0
    %122 = vmatprep.subr.mxu0 0.0
    %123 = vmatpush1.msra.mxu0 0.0
    %124 = vmatprep.subr.mxu0 0.0
    %125 = vmatpush1.msra.mxu0 0.0
    %126 = vmatprep.subr.mxu0 0.0
    %127 = vmatpush1.msra.mxu0 0.0
    %128 = vmatprep.subr.mxu0 0.0
    %129 = vmatpush1.msra.mxu0 0.0
    %130 = vmatprep.subr.mxu0 0.0
    %131 = vmatpush1.msra.mxu0 0.0
    %132 = vmatprep.mubr.f32.mxu0 0.0
    %133 = vmatmul.mubr.f32.gmra.mrb[0].mxu0 %v59
    %v134 = vpop.f32.mrb[0].mxu0
    %v135 = vadd.f32 %v50, %v134
    %v136 = vpop.f32.mrb[0].mxu0
    %v137 = vadd.f32 %v54, %v136
    %138 = vdwg.mxu0
    %vm139 = vcmp.gt.f32.partialorder %v135, 0.0
    %vm140 = vcmp.gt.f32.partialorder %v137, 0.0
    %v141 = vmul.f32 %v135, 0.01
    %v142 = vmul.f32 %v137, 0.01
    %v143 = vsel %vm139, %v135, %v141
    %v144 = vsel %vm140, %v137, %v142
    %v145 = vld [vmem:[#allocation2] sm:$0xff]
    %v146 = vld [vmem:[#allocation2 + $0x8] sm:$0xff]
    %v147 = vld [vmem:[#allocation2 + $0x10] sm:$0xff]
    %v148 = vld [vmem:[#allocation2 + $0x18] sm:$0xff]
    %v149 = vld [vmem:[#allocation2 + $0x20] sm:$0xff]
    %v150 = vld [vmem:[#allocation2 + $0x28] sm:$0xff]
    %v151 = vld [vmem:[#allocation2 + $0x30] sm:$0xff]
    %v152 = vld [vmem:[#allocation2 + $0x38] sm:$0xff]
    %v153 = vld [vmem:[#allocation2 + $0x40] sm:$0xff]
    %v154 = vld [vmem:[#allocation2 + $0x48] sm:$0xff]
    %v155 = vld [vmem:[#allocation2 + $0x50] sm:$0xff]
    %v156 = vld [vmem:[#allocation2 + $0x58] sm:$0xff]
    %v157 = vld [vmem:[#allocation2 + $0x60] sm:$0xff]
    %v158 = vld [vmem:[#allocation2 + $0x68] sm:$0xff]
    %v159 = vld [vmem:[#allocation2 + $0x70] sm:$0xff]
    %v160 = vld [vmem:[#allocation2 + $0x78] sm:$0xff]
    %v161 = vld [vmem:[#allocation2 + $0x80] sm:$0xff]
    %v162 = vld [vmem:[#allocation2 + $0x88] sm:$0xff]
    %v163 = vld [vmem:[#allocation2 + $0x90] sm:$0xff]
    %v164 = vld [vmem:[#allocation2 + $0x98] sm:$0xff]
    %v165 = vld [vmem:[#allocation2 + $0xa0] sm:$0xff]
    %v166 = vld [vmem:[#allocation2 + $0xa8] sm:$0xff]
    %v167 = vld [vmem:[#allocation2 + $0xb0] sm:$0xff]
    %v168 = vld [vmem:[#allocation2 + $0xb8] sm:$0xff]
    %v169 = vld [vmem:[#allocation2 + $0xc0] sm:$0xff]
    %v170 = vld [vmem:[#allocation2 + $0xc8] sm:$0xff]
    %v171 = vld [vmem:[#allocation2 + $0xd0] sm:$0xff]
    %v172 = vld [vmem:[#allocation2 + $0xd8] sm:$0xff]
    %v173 = vld [vmem:[#allocation2 + $0xe0] sm:$0xff]
    %v174 = vld [vmem:[#allocation2 + $0xe8] sm:$0xff]
    %v175 = vld [vmem:[#allocation2 + $0xf0] sm:$0xff]
    %v176 = vld [vmem:[#allocation2 + $0xf8] sm:$0xff]
    %v177 = vld [vmem:[%s4] sm:$0x1]
    %v179 = vlaneseq
    %v180 = vshrl.u32 %v179, 7
    %v181 = vsub.s32 0, %v180
    %v182 = vrot.slane %v177, %v181
    %184 = vmatprep.subr.mxu0 0.0
    %185 = vmatpush1.msra.mxu0 %v145
    %186 = vmatprep.subr.mxu0 0.0
    %187 = vmatpush1.msra.mxu0 %v146
    %188 = vmatprep.subr.mxu0 0.0
    %189 = vmatpush1.msra.mxu0 %v147
    %190 = vmatprep.subr.mxu0 0.0
    %191 = vmatpush1.msra.mxu0 %v148
    %192 = vmatprep.subr.mxu0 0.0
    %193 = vmatpush1.msra.mxu0 %v149
    %194 = vmatprep.subr.mxu0 0.0
    %195 = vmatpush1.msra.mxu0 %v150
    %196 = vmatprep.subr.mxu0 0.0
    %197 = vmatpush1.msra.mxu0 %v151
    %198 = vmatprep.subr.mxu0 0.0
    %199 = vmatpush1.msra.mxu0 %v152
    %200 = vmatprep.subr.mxu0 0.0
    %201 = vmatpush1.msra.mxu0 %v153
    %202 = vmatprep.subr.mxu0 0.0
    %203 = vmatpush1.msra.mxu0 %v154
    %204 = vmatprep.subr.mxu0 0.0
    %205 = vmatpush1.msra.mxu0 %v155
    %206 = vmatprep.subr.mxu0 0.0
    %207 = vmatpush1.msra.mxu0 %v156
    %208 = vmatprep.subr.mxu0 0.0
    %209 = vmatpush1.msra.mxu0 %v157
    %210 = vmatprep.subr.mxu0 0.0
    %211 = vmatpush1.msra.mxu0 %v158
    %212 = vmatprep.subr.mxu0 0.0
    %213 = vmatpush1.msra.mxu0 %v159
    %214 = vmatprep.subr.mxu0 0.0
    %215 = vmatpush1.msra.mxu0 %v160
    %216 = vmatprep.subr.mxu0 0.0
    %217 = vmatpush1.msra.mxu0 %v161
    %218 = vmatprep.subr.mxu0 0.0
    %219 = vmatpush1.msra.mxu0 %v162
    %220 = vmatprep.subr.mxu0 0.0
    %221 = vmatpush1.msra.mxu0 %v163
    %222 = vmatprep.subr.mxu0 0.0
    %223 = vmatpush1.msra.mxu0 %v164
    %224 = vmatprep.subr.mxu0 0.0
    %225 = vmatpush1.msra.mxu0 %v165
    %226 = vmatprep.subr.mxu0 0.0
    %227 = vmatpush1.msra.mxu0 %v166
    %228 = vmatprep.subr.mxu0 0.0
    %229 = vmatpush1.msra.mxu0 %v167
    %230 = vmatprep.subr.mxu0 0.0
    %231 = vmatpush1.msra.mxu0 %v168
    %232 = vmatprep.subr.mxu0 0.0
    %233 = vmatpush1.msra.mxu0 %v169
    %234 = vmatprep.subr.mxu0 0.0
    %235 = vmatpush1.msra.mxu0 %v170
    %236 = vmatprep.subr.mxu0 0.0
    %237 = vmatpush1.msra.mxu0 %v171
    %238 = vmatprep.subr.mxu0 0.0
    %239 = vmatpush1.msra.mxu0 %v172
    %240 = vmatprep.subr.mxu0 0.0
    %241 = vmatpush1.msra.mxu0 %v173
    %242 = vmatprep.subr.mxu0 0.0
    %243 = vmatpush1.msra.mxu0 %v174
    %244 = vmatprep.subr.mxu0 0.0
    %245 = vmatpush1.msra.mxu0 %v175
    %246 = vmatprep.subr.mxu0 0.0
    %247 = vmatpush1.msra.mxu0 %v176
    %248 = vmatprep.mubr.f32.mxu0 %v144
    %249 = vmatmul.mubr.f32.gmra.mrb[0].mxu0 %v143
    %v250 = vpop.f32.mrb[0].mxu0
    %v251 = vadd.f32 %v182, %v250
    %v252 = vpop.f32.mrb[0].mxu0
    %253 = vdwg.mxu0
    %vm254 = vcmp.gt.f32.partialorder %v251, 0.0
    %v255 = vmul.f32 %v251, 0.01
    %v256 = vsel %vm254, %v251, %v255
    %v257 = vld [vmem:[%s5] sm:$0xff]
    %v258 = vld [vmem:[%s5 + $0x8] sm:$0xff]
    %v259 = vld [vmem:[%s5 + $0x10] sm:$0xff]
    %v260 = vld [vmem:[%s5 + $0x18] sm:$0xff]
    %v261 = vld [vmem:[%s5 + $0x20] sm:$0xff]
    %v262 = vld [vmem:[%s5 + $0x28] sm:$0xff]
    %v263 = vld [vmem:[%s5 + $0x30] sm:$0xff]
    %v264 = vld [vmem:[%s5 + $0x38] sm:$0xff]
    %v265 = vld [vmem:[%s5 + $0x40] sm:$0xff]
    %v266 = vld [vmem:[%s5 + $0x48] sm:$0xff]
    %v267 = vld [vmem:[%s5 + $0x50] sm:$0xff]
    %v268 = vld [vmem:[%s5 + $0x58] sm:$0xff]
    %v269 = vld [vmem:[%s5 + $0x60] sm:$0xff]
    %v270 = vld [vmem:[%s5 + $0x68] sm:$0xff]
    %v271 = vld [vmem:[%s5 + $0x70] sm:$0xff]
    %v272 = vld [vmem:[%s5 + $0x78] sm:$0xff]
    %v273 = vld [vmem:[%s6] sm:$0x1]
    %v275 = vlaneseq
    %v276 = vshrl.u32 %v275, 7
    %v277 = vsub.s32 0, %v276
    %v278 = vrot.slane %v273, %v277
    %280 = vmatprep.subr.mxu0 0.0
    %281 = vmatpush1.msra.mxu0 %v257
    %282 = vmatprep.subr.mxu0 0.0
    %283 = vmatpush1.msra.mxu0 %v258
    %284 = vmatprep.subr.mxu0 0.0
    %285 = vmatpush1.msra.mxu0 %v259
    %286 = vmatprep.subr.mxu0 0.0
    %287 = vmatpush1.msra.mxu0 %v260
    %288 = vmatprep.subr.mxu0 0.0
    %289 = vmatpush1.msra.mxu0 %v261
    %290 = vmatprep.subr.mxu0 0.0
    %291 = vmatpush1.msra.mxu0 %v262
    %292 = vmatprep.subr.mxu0 0.0
    %293 = vmatpush1.msra.mxu0 %v263
    %294 = vmatprep.subr.mxu0 0.0
    %295 = vmatpush1.msra.mxu0 %v264
    %296 = vmatprep.subr.mxu0 0.0
    %297 = vmatpush1.msra.mxu0 %v265
    %298 = vmatprep.subr.mxu0 0.0
    %299 = vmatpush1.msra.mxu0 %v266
    %300 = vmatprep.subr.mxu0 0.0
    %301 = vmatpush1.msra.mxu0 %v267
    %302 = vmatprep.subr.mxu0 0.0
    %303 = vmatpush1.msra.mxu0 %v268
    %304 = vmatprep.subr.mxu0 0.0
    %305 = vmatpush1.msra.mxu0 %v269
    %306 = vmatprep.subr.mxu0 0.0
    %307 = vmatpush1.msra.mxu0 %v270
    %308 = vmatprep.subr.mxu0 0.0
    %309 = vmatpush1.msra.mxu0 %v271
    %310 = vmatprep.subr.mxu0 0.0
    %311 = vmatpush1.msra.mxu0 %v272
    %312 = vmatprep.subr.mxu0 0.0
    %313 = vmatpush1.msra.mxu0 0.0
    %314 = vmatprep.subr.mxu0 0.0
    %315 = vmatpush1.msra.mxu0 0.0
    %316 = vmatprep.subr.mxu0 0.0
    %317 = vmatpush1.msra.mxu0 0.0
    %318 = vmatprep.subr.mxu0 0.0
    %319 = vmatpush1.msra.mxu0 0.0
    %320 = vmatprep.subr.mxu0 0.0
    %321 = vmatpush1.msra.mxu0 0.0
    %322 = vmatprep.subr.mxu0 0.0
    %323 = vmatpush1.msra.mxu0 0.0
    %324 = vmatprep.subr.mxu0 0.0
    %325 = vmatpush1.msra.mxu0 0.0
    %326 = vmatprep.subr.mxu0 0.0
    %327 = vmatpush1.msra.mxu0 0.0
    %328 = vmatprep.subr.mxu0 0.0
    %329 = vmatpush1.msra.mxu0 0.0
    %330 = vmatprep.subr.mxu0 0.0
    %331 = vmatpush1.msra.mxu0 0.0
    %332 = vmatprep.subr.mxu0 0.0
    %333 = vmatpush1.msra.mxu0 0.0
    %334 = vmatprep.subr.mxu0 0.0
    %335 = vmatpush1.msra.mxu0 0.0
    %336 = vmatprep.subr.mxu0 0.0
    %337 = vmatpush1.msra.mxu0 0.0
    %338 = vmatprep.subr.mxu0 0.0
    %339 = vmatpush1.msra.mxu0 0.0
    %340 = vmatprep.subr.mxu0 0.0
    %341 = vmatpush1.msra.mxu0 0.0
    %342 = vmatprep.subr.mxu0 0.0
    %343 = vmatpush1.msra.mxu0 0.0
    %344 = vmatprep.mubr.f32.mxu0 0.0
    %345 = vmatmul.mubr.f32.gmra.mrb[0].mxu0 %v256
    %v346 = vpop.f32.mrb[0].mxu0
    %v347 = vadd.f32 %v278, %v346
    %v348 = vpop.f32.mrb[0].mxu0
    %349 = vdwg.mxu0
    %vm350 = vcmask 23552
    %351 = vst.msk [vmem:[%s7] sm:$0xff] %vm350, %v347
    // Predicated region
    $region34: #{tpu_custom_call.1} parent=1 // pred_check
      _
    $region35: #{tpu_custom_call.1} parent=1 // pred_check_branch
      %353 = sbr.rel (0) target = $region37
    $region36: #{tpu_custom_call.1} parent=1 // pred_region
      _
    $region37: #{tpu_custom_call.1} parent=1 // pred_fallthru
      _
    // Predicated region
    $region38: #{tpu_custom_call.1} parent=1 // pred_check
      _
    $region39: #{tpu_custom_call.1} parent=1 // pred_check_branch
      %355 = sbr.rel (0) target = $region41
    $region40: #{tpu_custom_call.1} parent=1 // pred_region
      _
    $region41: #{tpu_custom_call.1} parent=1 // pred_fallthru
      _
    %356 = vsyncpa [#allocation3], 1

</llo_original>
